<compile_context>
chip_gen: v7x
topology: tpu7x:2x2x1
jax: 0.10.0
libtpu: 0.0.40
codegen_flags: <defaults>
</compile_context>

<pallas_src>
import jax
import jax.numpy as jnp
from jax.experimental import pallas as pl
from jax.experimental.pallas import tpu as pltpu


def attention_gru_cell_kernel(fact_ref, c_ref, g_ref,
                              w_fact_ref, w_c_ref,
                              b_fact_ref, b_u_ref,
                              h_ref):
    f32 = jnp.float32
    fact = fact_ref[...].astype(f32)          # (BM, I)  (bf16 -> f32 upcast in vregs)
    C = c_ref[...].astype(f32)                # (BM, H)
    H = C.shape[-1]

    # Two fused MXU matmuls instead of four small Linear layers; f32 accumulate.
    yf = jnp.dot(fact, w_fact_ref[...], preferred_element_type=f32) + b_fact_ref[...]  # (BM, 2H)
    yc = jnp.dot(C, w_c_ref[...], preferred_element_type=f32)                          # (BM, 2H)

    # r = sigmoid(Wr(fact) + Ur(C)); h_tilda = tanh(W(fact) + r * U(C))
    r = jax.nn.sigmoid(yf[:, :H] + yc[:, :H])
    h_tilda = jnp.tanh(yf[:, H:] + r * (yc[:, H:] + b_u_ref[...]))

    g = g_ref[...].astype(f32)                # (BM, 1), broadcast over H lanes
    # h = g*h_tilda + (1-g)*C, rewritten to save one (BM, H) multiply.
    h_ref[...] = (C + g * (h_tilda - C)).astype(h_ref.dtype)


def make_params(input_size, hidden_size, key):
    """Init matching the PyTorch module (xavier_normal_ weights, default
    Linear bias init), then pre-fuse/transpose for the kernel."""
    H, I = hidden_size, input_size
    ks = jax.random.split(key, 8)

    def xavier(k, shape):                # torch Linear weight layout: (out, in)
        fan_out, fan_in = shape
        std = (2.0 / (fan_in + fan_out)) ** 0.5
        return std * jax.random.normal(k, shape, dtype=jnp.float32)

    def bias(k, fan_in):
        b = 1.0 / (fan_in ** 0.5)
        return jax.random.uniform(k, (H,), jnp.float32, -b, b)

    Wr, Ur = xavier(ks[0], (H, I)), xavier(ks[1], (H, H))
    W,  U  = xavier(ks[2], (H, I)), xavier(ks[3], (H, H))
    b_wr, b_ur = bias(ks[4], I), bias(ks[5], H)
    b_w,  b_u  = bias(ks[6], I), bias(ks[7], H)

    return {
        # fused, pre-transposed weights: one matmul for fact, one for C
        "w_fact": jnp.concatenate([Wr.T, W.T], axis=1),            # (I, 2H)
        "w_c":    jnp.concatenate([Ur.T, U.T], axis=1),            # (H, 2H)
        # pre-summed biases: [b_Wr + b_Ur | b_W]; b_U stays separate (inside r*U(C))
        "b_fact": jnp.concatenate([b_wr + b_ur, b_w])[None, :],    # (1, 2H)
        "b_u":    b_u[None, :],                                    # (1, H)
    }


def attention_gru_cell_ref(fact, C, g, params):
    """Pure-JAX reference: identical f32 math on the same (possibly bf16-cast)
    inputs, HIGHEST-precision matmuls."""
    f32 = jnp.float32
    fact = fact.astype(f32)
    C = C.astype(f32)
    g = g.astype(f32)
    H = C.shape[-1]
    hp = jax.lax.Precision.HIGHEST
    yf = jnp.dot(fact, params["w_fact"], precision=hp) + params["b_fact"]
    yc = jnp.dot(C, params["w_c"], precision=hp)
    r = jax.nn.sigmoid(yf[:, :H] + yc[:, :H])
    h_tilda = jnp.tanh(yf[:, H:] + r * (yc[:, H:] + params["b_u"]))
    gg = g[:, None]
    return C + gg * (h_tilda - C)


def _round_up(x, m):
    return ((x + m - 1) // m) * m


def _choose_batch_tile(B, sublane):
    """Large tiles (~512-1024 rows) for HBM-roofline efficiency, but >=2 grid
    tiles whenever B > 128 so v7x's two TensorCores both get work."""
    if B <= 128:
        return B                      # single tile equal to the full batch dim
    n_tiles = max(2, pl.cdiv(B, 1024))
    return _round_up(pl.cdiv(B, n_tiles), sublane)


def attention_gru_cell_forward(fact, C, g, params, *, out_dtype=None):
    """fact: (B, I), C: (B, H), g: (B,)  ->  h: (B, H).

    Activations are streamed in the dtype they arrive in (bf16 recommended);
    the kernel does all accumulation / gate math in f32.  No padding copies:
    a ragged final batch tile is handled by Pallas boundary clipping.
    Note: I and H should be multiples of 128 for fully lane-dense loads/stores
    (other sizes are correct but use masked vector accesses)."""
    B, I = fact.shape
    _, H = C.shape
    if out_dtype is None:
        out_dtype = C.dtype

    g2 = g.reshape(B, 1)

    # Sublane granularity for the batch tile: 8 for f32, 16 for bf16, etc.
    sub = max(32 // jnp.dtype(dt).itemsize
              for dt in (fact.dtype, C.dtype, g2.dtype, jnp.dtype(out_dtype)))
    bm = _choose_batch_tile(B, sub)
    grid = (pl.cdiv(B, bm),)

    row_spec = lambda cols: pl.BlockSpec((bm, cols), lambda i: (i, 0))
    rep_spec = lambda rows, cols: pl.BlockSpec((rows, cols), lambda i: (0, 0))

    return pl.pallas_call(
        attention_gru_cell_kernel,
        out_shape=jax.ShapeDtypeStruct((B, H), out_dtype),
        grid=grid,
        in_specs=[
            row_spec(I),            # fact
            row_spec(H),            # C
            row_spec(1),            # g
            rep_spec(I, 2 * H),     # fused [Wr^T | W^T]   (constant block index)
            rep_spec(H, 2 * H),     # fused [Ur^T | U^T]   (constant block index)
            rep_spec(1, 2 * H),     # fused bias [b_Wr + b_Ur | b_W]
            rep_spec(1, H),         # b_U
        ],
        out_specs=row_spec(H),
        compiler_params=pltpu.CompilerParams(
            dimension_semantics=("parallel",),   # batch tiles shard across TCs on v7x
            vmem_limit_bytes=32 * 1024 * 1024,
        ),
    )(fact, C, g2,
      params["w_fact"], params["w_c"], params["b_fact"], params["b_u"])


if __name__ == "__main__":
    INPUT_SIZE = 128     # lane-dense sizes (multiples of 128)
    HIDDEN_SIZE = 128

    key = jax.random.PRNGKey(0)
    kp, kf, kc, kg = jax.random.split(key, 4)
    params = make_params(INPUT_SIZE, HIDDEN_SIZE, kp)

    # --- Test 1: small batch, all-f32 path, single tile, tight tolerance. ---
    B1 = 8
    fact1 = jax.random.normal(kf, (B1, INPUT_SIZE), dtype=jnp.float32)
    C1 = jax.random.normal(kc, (B1, HIDDEN_SIZE), dtype=jnp.float32)
    g1 = jax.nn.sigmoid(jax.random.normal(kg, (B1,), dtype=jnp.float32))

    h1 = attention_gru_cell_forward(fact1, C1, g1, params)
    jax.block_until_ready(h1)
    assert h1.shape == (B1, HIDDEN_SIZE) and h1.dtype == jnp.float32
    ref1 = attention_gru_cell_ref(fact1, C1, g1, params)
    err1 = float(jnp.max(jnp.abs(h1 - ref1)))
    assert err1 < 5e-5, f"f32 path mismatch vs reference: {err1}"

    # --- Test 2: larger batch, bf16-streamed activations, multi-tile grid with
    #     a ragged tail (no jnp.pad; exercises boundary-clipped blocks). ---
    B2 = 300
    kf2, kc2, kg2 = jax.random.split(jax.random.PRNGKey(1), 3)
    fact2 = jax.random.normal(kf2, (B2, INPUT_SIZE), dtype=jnp.float32).astype(jnp.bfloat16)
    C2 = jax.random.normal(kc2, (B2, HIDDEN_SIZE), dtype=jnp.float32).astype(jnp.bfloat16)
    g2 = jax.nn.sigmoid(jax.random.normal(kg2, (B2,), dtype=jnp.float32)).astype(jnp.bfloat16)

    h2 = attention_gru_cell_forward(fact2, C2, g2, params)   # bf16 in, bf16 out
    jax.block_until_ready(h2)
    assert h2.shape == (B2, HIDDEN_SIZE) and h2.dtype == jnp.bfloat16
    ref2 = attention_gru_cell_ref(fact2, C2, g2, params)     # f32 math on same bf16 inputs
    err2 = float(jnp.max(jnp.abs(h2.astype(jnp.float32) - ref2) / (1.0 + jnp.abs(ref2))))
    assert err2 < 1e-2, f"bf16 path mismatch vs reference: {err2}"

    print("KERNEL_OK")
</pallas_src>

<mosaic_0001>
module attributes {stable_mosaic.version = 11 : i64} {
  func.func @attention_gru_cell_kernel(%arg0: i32, %arg1: memref<8x128xf32, #tpu.memory_space<vmem>>, %arg2: memref<8x128xf32, #tpu.memory_space<vmem>>, %arg3: memref<8x1xf32, #tpu.memory_space<vmem>>, %arg4: memref<128x256xf32, #tpu.memory_space<vmem>>, %arg5: memref<128x256xf32, #tpu.memory_space<vmem>>, %arg6: memref<1x256xf32, #tpu.memory_space<vmem>>, %arg7: memref<1x128xf32, #tpu.memory_space<vmem>>, %arg8: memref<8x128xf32, #tpu.memory_space<vmem>>) attributes {dimension_semantics = [#tpu.dimension_semantics<parallel>], iteration_bounds = array<i64: 1>, scalar_prefetch = 0 : i64, scratch_operands = 0 : i64, tpu.core_type = #tpu.core_type<tc>, window_params = [{transform_indices = @transform_0, window_bounds = array<i64: 8, 128>}, {transform_indices = @transform_1, window_bounds = array<i64: 8, 128>}, {transform_indices = @transform_2, window_bounds = array<i64: 8, 1>}, {pipeline_mode = #tpu.pipeline_mode<synchronous>, transform_indices = @transform_3, window_bounds = array<i64: 128, 256>}, {pipeline_mode = #tpu.pipeline_mode<synchronous>, transform_indices = @transform_4, window_bounds = array<i64: 128, 256>}, {pipeline_mode = #tpu.pipeline_mode<synchronous>, transform_indices = @transform_5, window_bounds = array<i64: 1, 256>}, {pipeline_mode = #tpu.pipeline_mode<synchronous>, transform_indices = @transform_6, window_bounds = array<i64: 1, 128>}, {transform_indices = @transform_7, window_bounds = array<i64: 8, 128>}]} {
    %c0 = arith.constant 0 : index
    %c0_0 = arith.constant 0 : index
    %0 = vector.load %arg1[%c0, %c0_0] : memref<8x128xf32, #tpu.memory_space<vmem>>, vector<8x128xf32>
    %c0_1 = arith.constant 0 : index
    %c0_2 = arith.constant 0 : index
    %1 = vector.load %arg2[%c0_1, %c0_2] : memref<8x128xf32, #tpu.memory_space<vmem>>, vector<8x128xf32>
    %c0_3 = arith.constant 0 : index
    %c0_4 = arith.constant 0 : index
    %2 = vector.load %arg4[%c0_3, %c0_4] : memref<128x256xf32, #tpu.memory_space<vmem>>, vector<128x256xf32>
    %cst = arith.constant dense<0.000000e+00> : vector<8x256xf32>
    %3 = tpu.matmul %0, %2, %cst {dimension_numbers = #tpu.dot_dimension_numbers<[1], [0], [0], [1], [0, 0, 1, 1], [], []>} : vector<8x128xf32>, vector<128x256xf32>, vector<8x256xf32> -> vector<8x256xf32>
    %c0_5 = arith.constant 0 : index
    %c0_6 = arith.constant 0 : index
    %4 = vector.load %arg6[%c0_5, %c0_6] : memref<1x256xf32, #tpu.memory_space<vmem>>, vector<1x256xf32>
    %5 = vector.broadcast %4 : vector<1x256xf32> to vector<8x256xf32>
    %6 = arith.addf %3, %5 : vector<8x256xf32>
    %c0_7 = arith.constant 0 : index
    %c0_8 = arith.constant 0 : index
    %7 = vector.load %arg5[%c0_7, %c0_8] : memref<128x256xf32, #tpu.memory_space<vmem>>, vector<128x256xf32>
    %cst_9 = arith.constant dense<0.000000e+00> : vector<8x256xf32>
    %8 = tpu.matmul %1, %7, %cst_9 {dimension_numbers = #tpu.dot_dimension_numbers<[1], [0], [0], [1], [0, 0, 1, 1], [], []>} : vector<8x128xf32>, vector<128x256xf32>, vector<8x256xf32> -> vector<8x256xf32>
    %9 = vector.extract_strided_slice %6 {offsets = [0, 0], sizes = [8, 128], strides = [1, 1]} : vector<8x256xf32> to vector<8x128xf32>
    %10 = vector.extract_strided_slice %8 {offsets = [0, 0], sizes = [8, 128], strides = [1, 1]} : vector<8x256xf32> to vector<8x128xf32>
    %11 = arith.addf %9, %10 : vector<8x128xf32>
    %12 = arith.negf %11 : vector<8x128xf32>
    %13 = math.exp %12 : vector<8x128xf32>
    %cst_10 = arith.constant 1.000000e+00 : f32
    %14 = vector.broadcast %cst_10 : f32 to vector<8x128xf32>
    %15 = arith.addf %14, %13 : vector<8x128xf32>
    %16 = arith.divf %14, %15 : vector<8x128xf32>
    %17 = vector.extract_strided_slice %6 {offsets = [0, 128], sizes = [8, 128], strides = [1, 1]} : vector<8x256xf32> to vector<8x128xf32>
    %18 = vector.extract_strided_slice %8 {offsets = [0, 128], sizes = [8, 128], strides = [1, 1]} : vector<8x256xf32> to vector<8x128xf32>
    %c0_11 = arith.constant 0 : index
    %c0_12 = arith.constant 0 : index
    %19 = vector.load %arg7[%c0_11, %c0_12] : memref<1x128xf32, #tpu.memory_space<vmem>>, vector<1x128xf32>
    %20 = vector.broadcast %19 : vector<1x128xf32> to vector<8x128xf32>
    %21 = arith.addf %18, %20 : vector<8x128xf32>
    %22 = arith.mulf %16, %21 : vector<8x128xf32>
    %23 = arith.addf %17, %22 : vector<8x128xf32>
    %24 = math.tanh %23 : vector<8x128xf32>
    %c0_13 = arith.constant 0 : index
    %c0_14 = arith.constant 0 : index
    %25 = vector.load %arg3[%c0_13, %c0_14] : memref<8x1xf32, #tpu.memory_space<vmem>>, vector<8x1xf32>
    %26 = arith.subf %24, %1 : vector<8x128xf32>
    %27 = vector.broadcast %25 : vector<8x1xf32> to vector<8x128xf32>
    %28 = arith.mulf %27, %26 : vector<8x128xf32>
    %29 = arith.addf %1, %28 : vector<8x128xf32>
    %c0_15 = arith.constant 0 : index
    %c0_16 = arith.constant 0 : index
    %30 = vector.load %arg8[%c0_15, %c0_16] : memref<8x128xf32, #tpu.memory_space<vmem>>, vector<8x128xf32>
    tpu.vector_store %arg8[%c0_15, %c0_16], %29 {strides = array<i32>} : memref<8x128xf32, #tpu.memory_space<vmem>>, vector<8x128xf32>,
    return
  }
  func.func @transform_0(%arg0: i32) -> (i32, i32) {
    %c0_i32 = arith.constant 0 : i32
    %c0_i32_0 = arith.constant 0 : i32
    return %arg0, %c0_i32 : i32, i32
  }
  func.func @transform_1(%arg0: i32) -> (i32, i32) {
    %c0_i32 = arith.constant 0 : i32
    %c0_i32_0 = arith.constant 0 : i32
    return %arg0, %c0_i32 : i32, i32
  }
  func.func @transform_2(%arg0: i32) -> (i32, i32) {
    %c0_i32 = arith.constant 0 : i32
    %c0_i32_0 = arith.constant 0 : i32
    return %arg0, %c0_i32 : i32, i32
  }
  func.func @transform_3(%arg0: i32) -> (i32, i32) {
    %c0_i32 = arith.constant 0 : i32
    %c0_i32_0 = arith.constant 0 : i32
    %c0_i32_1 = arith.constant 0 : i32
    return %c0_i32, %c0_i32_0 : i32, i32
  }
  func.func @transform_4(%arg0: i32) -> (i32, i32) {
    %c0_i32 = arith.constant 0 : i32
    %c0_i32_0 = arith.constant 0 : i32
    %c0_i32_1 = arith.constant 0 : i32
    return %c0_i32, %c0_i32_0 : i32, i32
  }
  func.func @transform_5(%arg0: i32) -> (i32, i32) {
    %c0_i32 = arith.constant 0 : i32
    %c0_i32_0 = arith.constant 0 : i32
    %c0_i32_1 = arith.constant 0 : i32
    return %c0_i32, %c0_i32_0 : i32, i32
  }
  func.func @transform_6(%arg0: i32) -> (i32, i32) {
    %c0_i32 = arith.constant 0 : i32
    %c0_i32_0 = arith.constant 0 : i32
    %c0_i32_1 = arith.constant 0 : i32
    return %c0_i32, %c0_i32_0 : i32, i32
  }
  func.func @transform_7(%arg0: i32) -> (i32, i32) {
    %c0_i32 = arith.constant 0 : i32
    %c0_i32_0 = arith.constant 0 : i32
    return %arg0, %c0_i32 : i32, i32
  }
}

</mosaic_0001>

<llo_original>
// kernel: tpu_custom_call.1
$region0: #{tpu_custom_call.1}
  #allocation0 [shape = 'u32[]', space=smem, size = 0x4, offset = 0x4, fixed_abs, tag = 'smem constant byte address 0x4 - core index']
  #allocation1 [shape = 'u32[144,128]{1,0:T(1,128)}', space=vmem, size = 0x12000, scoped, tag = 'internal scratch']
  %s0 = inlined_call_operand.vmem [shape: f32[8,128], index: 0, kind: input, shape index: {}]
  %s1 = inlined_call_operand.hbm [shape: f32[8,128], index: 1, kind: input, shape index: {}]
  %s2 = inlined_call_operand.vmem [shape: f32[8,1], index: 2, kind: input, shape index: {}]
  %s3 = inlined_call_operand.hbm [shape: f32[128,256], index: 3, kind: input, shape index: {}]
  %s4 = inlined_call_operand.hbm [shape: f32[128,256], index: 4, kind: input, shape index: {}]
  %s5 = inlined_call_operand.vmem [shape: f32[1,256], index: 5, kind: input, shape index: {}]
  %s6 = inlined_call_operand.vmem [shape: f32[1,128], index: 6, kind: input, shape index: {}]
  %s7 = inlined_call_operand.hbm [shape: f32[8,128], index: 7, kind: output, shape index: {}]
  %s8 = sld [smem:[#allocation0]]
  $region50: #{tpu_custom_call.1} parent=0
    _
  %s10 = ssub.s32 1, %s8
  %s11 = scalar_select 0, %s10, %s8
  $region1: #{tpu_custom_call.1} parent=0
    #allocation2 [shape = 'u8[4096]{0}', space=vmem, size = 0x1000, scoped, tag = 'input window, operand 1, single buffered']
    #allocation3 [shape = 's32[1]{0}', space=sflag, size = 0x4, scoped, tag = 'scoped memory for tpu_custom_call.1']
    #allocation4 [shape = 's32[1]{0}', space=sflag, size = 0x4, scoped, tag = 'scoped memory for tpu_custom_call.1']
    #allocation5 [shape = 'u8[131072]{0}', space=vmem, size = 0x20000, scoped, tag = 'input window, operand 3, single buffered']
    #allocation6 [shape = 's32[1]{0}', space=sflag, size = 0x4, scoped, tag = 'scoped memory for tpu_custom_call.1']
    #allocation7 [shape = 'u8[131072]{0}', space=vmem, size = 0x20000, scoped, tag = 'input window, operand 4, single buffered']
    #allocation8 [shape = 'u8[4096]{0}', space=vmem, size = 0x1000, scoped, tag = 'output window, operand 0, single buffered']
    %12 = vsyncpa [#allocation3], 0
    %13 = vsyncpa [#allocation6], 0
    %14 = vsyncpa [#allocation4], 0
    // Predicated region
    $region2: #{tpu_custom_call.1} parent=1 // pred_check
      _
    $region3: #{tpu_custom_call.1} parent=1 // pred_check_branch
      %16 = sbr.rel (0) target = $region5
    $region4: #{tpu_custom_call.1} parent=1 // pred_region
      _
    $region5: #{tpu_custom_call.1} parent=1 // pred_fallthru
      _
    // Predicated region
    $region6: #{tpu_custom_call.1} parent=1 // pred_check
      _
    $region7: #{tpu_custom_call.1} parent=1 // pred_check_branch
      %18 = sbr.rel (0) target = $region9
    $region8: #{tpu_custom_call.1} parent=1 // pred_region
      %s20 = ssub.s32 128, 128
      %21 = vsyncadd [#allocation3], %s20
      %s23 = sshll.u32 [#allocation2], 4
      %s24 = int_to_ptr.vmem [resolvable:$true] %s23
      %26 = dma.hbm_to_vmem [thread:$0]  %s1, 128, %s24, [#allocation3]
    $region9: #{tpu_custom_call.1} parent=1 // pred_fallthru
      _
    // Predicated region
    $region10: #{tpu_custom_call.1} parent=1 // pred_check
      _
    $region11: #{tpu_custom_call.1} parent=1 // pred_check_branch
      %28 = sbr.rel (0) target = $region13
    $region12: #{tpu_custom_call.1} parent=1 // pred_region
      _
    $region13: #{tpu_custom_call.1} parent=1 // pred_fallthru
      _
    // Predicated region
    $region14: #{tpu_custom_call.1} parent=1 // pred_check
      _
    $region15: #{tpu_custom_call.1} parent=1 // pred_check_branch
      %30 = sbr.rel (0) target = $region17
    $region16: #{tpu_custom_call.1} parent=1 // pred_region
      %s32 = ssub.s32 4096, 4096
      %33 = vsyncadd [#allocation6], %s32
      %s34 = sshll.u32 [#allocation5], 4
      %s35 = int_to_ptr.vmem [resolvable:$true] %s34
      %40 = dma.hbm_to_vmem [thread:$0]  %s3, 4096, %s35, [#allocation6], 256, 256, 16
    $region17: #{tpu_custom_call.1} parent=1 // pred_fallthru
      _
    // Predicated region
    $region18: #{tpu_custom_call.1} parent=1 // pred_check
      _
    $region19: #{tpu_custom_call.1} parent=1 // pred_check_branch
      %42 = sbr.rel (0) target = $region21
    $region20: #{tpu_custom_call.1} parent=1 // pred_region
      %s44 = ssub.s32 4096, 4096
      %45 = vsyncadd [#allocation6], %s44
      %s46 = sshll.u32 [#allocation7], 4
      %s47 = int_to_ptr.vmem [resolvable:$true] %s46
      %52 = dma.hbm_to_vmem [thread:$0]  %s4, 4096, %s47, [#allocation6], 256, 256, 16
    $region21: #{tpu_custom_call.1} parent=1 // pred_fallthru
      _
    // Predicated region
    $region22: #{tpu_custom_call.1} parent=1 // pred_check
      _
    $region23: #{tpu_custom_call.1} parent=1 // pred_check_branch
      %54 = sbr.rel (0) target = $region25
    $region24: #{tpu_custom_call.1} parent=1 // pred_region
      _
    $region25: #{tpu_custom_call.1} parent=1 // pred_fallthru
      _
    // Predicated region
    $region26: #{tpu_custom_call.1} parent=1 // pred_check
      _
    $region27: #{tpu_custom_call.1} parent=1 // pred_check_branch
      %56 = sbr.rel (0) target = $region29
    $region28: #{tpu_custom_call.1} parent=1 // pred_region
      _
    $region29: #{tpu_custom_call.1} parent=1 // pred_fallthru
      _
    // Predicated region
    $region30: #{tpu_custom_call.1} parent=1 // pred_check
      _
    $region31: #{tpu_custom_call.1} parent=1 // pred_check_branch
      %58 = sbr.rel (0) target = $region33
    $region32: #{tpu_custom_call.1} parent=1 // pred_region
      %59 = dma.done [#allocation3], 128
    $region33: #{tpu_custom_call.1} parent=1 // pred_fallthru
      _
    // Predicated region
    $region34: #{tpu_custom_call.1} parent=1 // pred_check
      _
    $region35: #{tpu_custom_call.1} parent=1 // pred_check_branch
      %61 = sbr.rel (0) target = $region37
    $region36: #{tpu_custom_call.1} parent=1 // pred_region
      %62 = dma.done [#allocation6], 4096
    $region37: #{tpu_custom_call.1} parent=1 // pred_fallthru
      _
    // Predicated region
    $region38: #{tpu_custom_call.1} parent=1 // pred_check
      _
    $region39: #{tpu_custom_call.1} parent=1 // pred_check_branch
      %64 = sbr.rel (0) target = $region41
    $region40: #{tpu_custom_call.1} parent=1 // pred_region
      %65 = dma.done [#allocation6], 4096
    $region41: #{tpu_custom_call.1} parent=1 // pred_fallthru
      _
    %v66 = vld [vmem:[%s0] sm:$0xff]
    %v67 = vld [vmem:[#allocation2] sm:$0xff]
    %v68 = vld [vmem:[#allocation5] sm:$0xff]
    %v69 = vld [vmem:[#allocation5 + $0x8] sm:$0xff]
    %v70 = vld [vmem:[#allocation5 + $0x10] sm:$0xff]
    %v71 = vld [vmem:[#allocation5 + $0x18] sm:$0xff]
    %v72 = vld [vmem:[#allocation5 + $0x20] sm:$0xff]
    %v73 = vld [vmem:[#allocation5 + $0x28] sm:$0xff]
    %v74 = vld [vmem:[#allocation5 + $0x30] sm:$0xff]
    %v75 = vld [vmem:[#allocation5 + $0x38] sm:$0xff]
    %v76 = vld [vmem:[#allocation5 + $0x40] sm:$0xff]
    %v77 = vld [vmem:[#allocation5 + $0x48] sm:$0xff]
    %v78 = vld [vmem:[#allocation5 + $0x50] sm:$0xff]
    %v79 = vld [vmem:[#allocation5 + $0x58] sm:$0xff]
    %v80 = vld [vmem:[#allocation5 + $0x60] sm:$0xff]
    %v81 = vld [vmem:[#allocation5 + $0x68] sm:$0xff]
    %v82 = vld [vmem:[#allocation5 + $0x70] sm:$0xff]
    %v83 = vld [vmem:[#allocation5 + $0x78] sm:$0xff]
    %v84 = vld [vmem:[#allocation5 + $0x80] sm:$0xff]
    %v85 = vld [vmem:[#allocation5 + $0x88] sm:$0xff]
    %v86 = vld [vmem:[#allocation5 + $0x90] sm:$0xff]
    %v87 = vld [vmem:[#allocation5 + $0x98] sm:$0xff]
    %v88 = vld [vmem:[#allocation5 + $0xa0] sm:$0xff]
    %v89 = vld [vmem:[#allocation5 + $0xa8] sm:$0xff]
    %v90 = vld [vmem:[#allocation5 + $0xb0] sm:$0xff]
    %v91 = vld [vmem:[#allocation5 + $0xb8] sm:$0xff]
    %v92 = vld [vmem:[#allocation5 + $0xc0] sm:$0xff]
    %v93 = vld [vmem:[#allocation5 + $0xc8] sm:$0xff]
    %v94 = vld [vmem:[#allocation5 + $0xd0] sm:$0xff]
    %v95 = vld [vmem:[#allocation5 + $0xd8] sm:$0xff]
    %v96 = vld [vmem:[#allocation5 + $0xe0] sm:$0xff]
    %v97 = vld [vmem:[#allocation5 + $0xe8] sm:$0xff]
    %v98 = vld [vmem:[#allocation5 + $0xf0] sm:$0xff]
    %v99 = vld [vmem:[#allocation5 + $0xf8] sm:$0xff]
    %v100 = vld [vmem:[%s5] sm:$0x3]
    %v102 = vlaneseq
    %v103 = vshrl.u32 %v102, 7
    %v104 = vsub.s32 0, %v103
    %v105 = vrot.slane %v100, %v104
    %v106 = vlaneseq
    %v107 = vshrl.u32 %v106, 7
    %v108 = vsub.s32 1, %v107
    %v109 = vrot.slane %v100, %v108
    %112 = vmatprep.subr.mxu0 %v69
    %113 = vmatpush1.msra.mxu0 %v68
    %114 = vmatprep.subr.mxu0 %v71
    %115 = vmatpush1.msra.mxu0 %v70
    %116 = vmatprep.subr.mxu0 %v73
    %117 = vmatpush1.msra.mxu0 %v72
    %118 = vmatprep.subr.mxu0 %v75
    %119 = vmatpush1.msra.mxu0 %v74
    %120 = vmatprep.subr.mxu0 %v77
    %121 = vmatpush1.msra.mxu0 %v76
    %122 = vmatprep.subr.mxu0 %v79
    %123 = vmatpush1.msra.mxu0 %v78
    %124 = vmatprep.subr.mxu0 %v81
    %125 = vmatpush1.msra.mxu0 %v80
    %126 = vmatprep.subr.mxu0 %v83
    %127 = vmatpush1.msra.mxu0 %v82
    %128 = vmatprep.subr.mxu0 %v85
    %129 = vmatpush1.msra.mxu0 %v84
    %130 = vmatprep.subr.mxu0 %v87
    %131 = vmatpush1.msra.mxu0 %v86
    %132 = vmatprep.subr.mxu0 %v89
    %133 = vmatpush1.msra.mxu0 %v88
    %134 = vmatprep.subr.mxu0 %v91
    %135 = vmatpush1.msra.mxu0 %v90
    %136 = vmatprep.subr.mxu0 %v93
    %137 = vmatpush1.msra.mxu0 %v92
    %138 = vmatprep.subr.mxu0 %v95
    %139 = vmatpush1.msra.mxu0 %v94
    %140 = vmatprep.subr.mxu0 %v97
    %141 = vmatpush1.msra.mxu0 %v96
    %142 = vmatprep.subr.mxu0 %v99
    %143 = vmatpush1.msra.mxu0 %v98
    %144 = vmatprep.subr.mxu0 0.0
    %145 = vmatpush1.msra.mxu0 0.0
    %146 = vmatprep.subr.mxu0 0.0
    %147 = vmatpush1.msra.mxu0 0.0
    %148 = vmatprep.subr.mxu0 0.0
    %149 = vmatpush1.msra.mxu0 0.0
    %150 = vmatprep.subr.mxu0 0.0
    %151 = vmatpush1.msra.mxu0 0.0
    %152 = vmatprep.subr.mxu0 0.0
    %153 = vmatpush1.msra.mxu0 0.0
    %154 = vmatprep.subr.mxu0 0.0
    %155 = vmatpush1.msra.mxu0 0.0
    %156 = vmatprep.subr.mxu0 0.0
    %157 = vmatpush1.msra.mxu0 0.0
    %158 = vmatprep.subr.mxu0 0.0
    %159 = vmatpush1.msra.mxu0 0.0
    %160 = vmatprep.subr.mxu0 0.0
    %161 = vmatpush1.msra.mxu0 0.0
    %162 = vmatprep.subr.mxu0 0.0
    %163 = vmatpush1.msra.mxu0 0.0
    %164 = vmatprep.subr.mxu0 0.0
    %165 = vmatpush1.msra.mxu0 0.0
    %166 = vmatprep.subr.mxu0 0.0
    %167 = vmatpush1.msra.mxu0 0.0
    %168 = vmatprep.subr.mxu0 0.0
    %169 = vmatpush1.msra.mxu0 0.0
    %170 = vmatprep.subr.mxu0 0.0
    %171 = vmatpush1.msra.mxu0 0.0
    %172 = vmatprep.subr.mxu0 0.0
    %173 = vmatpush1.msra.mxu0 0.0
    %174 = vmatprep.subr.mxu0 0.0
    %175 = vmatpush1.msra.mxu0 0.0
    %176 = vmatprep.mubr.f32.mxu0 0.0
    %177 = vmatmul.mubr.f32.gmra.mrb[0].mxu0 %v66
    %v178 = vpop.f32.mrb[0].mxu0
    %v179 = vadd.f32 %v105, %v178
    %v180 = vpop.f32.mrb[0].mxu0
    %v181 = vadd.f32 %v109, %v180
    %182 = vdwg.mxu0
    %v183 = vld [vmem:[#allocation7] sm:$0xff]
    %v184 = vld [vmem:[#allocation7 + $0x8] sm:$0xff]
    %v185 = vld [vmem:[#allocation7 + $0x10] sm:$0xff]
    %v186 = vld [vmem:[#allocation7 + $0x18] sm:$0xff]
    %v187 = vld [vmem:[#allocation7 + $0x20] sm:$0xff]
    %v188 = vld [vmem:[#allocation7 + $0x28] sm:$0xff]
    %v189 = vld [vmem:[#allocation7 + $0x30] sm:$0xff]
    %v190 = vld [vmem:[#allocation7 + $0x38] sm:$0xff]
    %v191 = vld [vmem:[#allocation7 + $0x40] sm:$0xff]
    %v192 = vld [vmem:[#allocation7 + $0x48] sm:$0xff]
    %v193 = vld [vmem:[#allocation7 + $0x50] sm:$0xff]
    %v194 = vld [vmem:[#allocation7 + $0x58] sm:$0xff]
    %v195 = vld [vmem:[#allocation7 + $0x60] sm:$0xff]
    %v196 = vld [vmem:[#allocation7 + $0x68] sm:$0xff]
    %v197 = vld [vmem:[#allocation7 + $0x70] sm:$0xff]
    %v198 = vld [vmem:[#allocation7 + $0x78] sm:$0xff]
    %v199 = vld [vmem:[#allocation7 + $0x80] sm:$0xff]
    %v200 = vld [vmem:[#allocation7 + $0x88] sm:$0xff]
    %v201 = vld [vmem:[#allocation7 + $0x90] sm:$0xff]
    %v202 = vld [vmem:[#allocation7 + $0x98] sm:$0xff]
    %v203 = vld [vmem:[#allocation7 + $0xa0] sm:$0xff]
    %v204 = vld [vmem:[#allocation7 + $0xa8] sm:$0xff]
    %v205 = vld [vmem:[#allocation7 + $0xb0] sm:$0xff]
    %v206 = vld [vmem:[#allocation7 + $0xb8] sm:$0xff]
    %v207 = vld [vmem:[#allocation7 + $0xc0] sm:$0xff]
    %v208 = vld [vmem:[#allocation7 + $0xc8] sm:$0xff]
    %v209 = vld [vmem:[#allocation7 + $0xd0] sm:$0xff]
    %v210 = vld [vmem:[#allocation7 + $0xd8] sm:$0xff]
    %v211 = vld [vmem:[#allocation7 + $0xe0] sm:$0xff]
    %v212 = vld [vmem:[#allocation7 + $0xe8] sm:$0xff]
    %v213 = vld [vmem:[#allocation7 + $0xf0] sm:$0xff]
    %v214 = vld [vmem:[#allocation7 + $0xf8] sm:$0xff]
    %215 = vmatprep.subr.mxu0 %v184
    %216 = vmatpush1.msra.mxu0 %v183
    %217 = vmatprep.subr.mxu0 %v186
    %218 = vmatpush1.msra.mxu0 %v185
    %219 = vmatprep.subr.mxu0 %v188
    %220 = vmatpush1.msra.mxu0 %v187
    %221 = vmatprep.subr.mxu0 %v190
    %222 = vmatpush1.msra.mxu0 %v189
    %223 = vmatprep.subr.mxu0 %v192
    %224 = vmatpush1.msra.mxu0 %v191
    %225 = vmatprep.subr.mxu0 %v194
    %226 = vmatpush1.msra.mxu0 %v193
    %227 = vmatprep.subr.mxu0 %v196
    %228 = vmatpush1.msra.mxu0 %v195
    %229 = vmatprep.subr.mxu0 %v198
    %230 = vmatpush1.msra.mxu0 %v197
    %231 = vmatprep.subr.mxu0 %v200
    %232 = vmatpush1.msra.mxu0 %v199
    %233 = vmatprep.subr.mxu0 %v202
    %234 = vmatpush1.msra.mxu0 %v201
    %235 = vmatprep.subr.mxu0 %v204
    %236 = vmatpush1.msra.mxu0 %v203
    %237 = vmatprep.subr.mxu0 %v206
    %238 = vmatpush1.msra.mxu0 %v205
    %239 = vmatprep.subr.mxu0 %v208
    %240 = vmatpush1.msra.mxu0 %v207
    %241 = vmatprep.subr.mxu0 %v210
    %242 = vmatpush1.msra.mxu0 %v209
    %243 = vmatprep.subr.mxu0 %v212
    %244 = vmatpush1.msra.mxu0 %v211
    %245 = vmatprep.subr.mxu0 %v214
    %246 = vmatpush1.msra.mxu0 %v213
    %247 = vmatprep.subr.mxu0 0.0
    %248 = vmatpush1.msra.mxu0 0.0
    %249 = vmatprep.subr.mxu0 0.0
    %250 = vmatpush1.msra.mxu0 0.0
    %251 = vmatprep.subr.mxu0 0.0
    %252 = vmatpush1.msra.mxu0 0.0
    %253 = vmatprep.subr.mxu0 0.0
    %254 = vmatpush1.msra.mxu0 0.0
    %255 = vmatprep.subr.mxu0 0.0
    %256 = vmatpush1.msra.mxu0 0.0
    %257 = vmatprep.subr.mxu0 0.0
    %258 = vmatpush1.msra.mxu0 0.0
    %259 = vmatprep.subr.mxu0 0.0
    %260 = vmatpush1.msra.mxu0 0.0
    %261 = vmatprep.subr.mxu0 0.0
    %262 = vmatpush1.msra.mxu0 0.0
    %263 = vmatprep.subr.mxu0 0.0
    %264 = vmatpush1.msra.mxu0 0.0
    %265 = vmatprep.subr.mxu0 0.0
    %266 = vmatpush1.msra.mxu0 0.0
    %267 = vmatprep.subr.mxu0 0.0
    %268 = vmatpush1.msra.mxu0 0.0
    %269 = vmatprep.subr.mxu0 0.0
    %270 = vmatpush1.msra.mxu0 0.0
    %271 = vmatprep.subr.mxu0 0.0
    %272 = vmatpush1.msra.mxu0 0.0
    %273 = vmatprep.subr.mxu0 0.0
    %274 = vmatpush1.msra.mxu0 0.0
    %275 = vmatprep.subr.mxu0 0.0
    %276 = vmatpush1.msra.mxu0 0.0
    %277 = vmatprep.subr.mxu0 0.0
    %278 = vmatpush1.msra.mxu0 0.0
    %279 = vmatprep.mubr.f32.mxu0 0.0
    %280 = vmatmul.mubr.f32.gmra.mrb[0].mxu0 %v67
    %v281 = vpop.f32.mrb[0].mxu0
    %v282 = vadd.f32 0.0, %v281
    %v283 = vpop.f32.mrb[0].mxu0
    %v284 = vadd.f32 0.0, %v283
    %285 = vdwg.mxu0
    %v286 = vadd.f32 %v179, %v282
    %v287 = vxor.u32 %v286, 2147483648
    %v288 = vmul.f32 %v287, 1.442695
    %v289 = vpow.pop %v288
    %v290 = vadd.f32 %v289, 1.0
    %v291 = vrcp.pop %v290
    %v292 = vmul.f32 1.0, %v291
    %v293 = vld [vmem:[%s6] sm:$0x1]
    %v295 = vlaneseq
    %v296 = vshrl.u32 %v295, 7
    %v297 = vsub.s32 0, %v296
    %v298 = vrot.slane %v293, %v297
    %v300 = vadd.f32 %v284, %v298
    %v301 = vmul.f32 %v292, %v300
    %v302 = vadd.f32 %v181, %v301
    %v303 = vtanh.pop %v302
    %v304 = vld [vmem:[%s2] sm:$0xff]
    %v305 = vsub.f32 %v303, %v67
    %307 = vset.pattern.permute.xlu0 0
    %308 = vperm.xlu0 %307, %v304
    %v309 = vpop.permute.xlu0 %308
    %v311 = vmul.f32 %v309, %v305
    %v312 = vadd.f32 %v67, %v311
    %313 = vst [vmem:[#allocation8] sm:$0xff] %v312
    // Predicated region
    $region42: #{tpu_custom_call.1} parent=1 // pred_check
      _
    $region43: #{tpu_custom_call.1} parent=1 // pred_check_branch
      %315 = sbr.rel (0) target = $region45
    $region44: #{tpu_custom_call.1} parent=1 // pred_region
      %s317 = ssub.s32 128, 128
      %318 = vsyncadd [#allocation4], %s317
      %s320 = sshll.u32 [#allocation8], 4
      %s321 = int_to_ptr.vmem [resolvable:$true] %s320
      %323 = dma.vmem_to_hbm [thread:$0]  %s321, 128, %s7, [#allocation4]
    $region45: #{tpu_custom_call.1} parent=1 // pred_fallthru
      _
    // Predicated region
    $region46: #{tpu_custom_call.1} parent=1 // pred_check
      _
    $region47: #{tpu_custom_call.1} parent=1 // pred_check_branch
      %325 = sbr.rel (0) target = $region49
    $region48: #{tpu_custom_call.1} parent=1 // pred_region
      %326 = dma.done [#allocation4], 128
    $region49: #{tpu_custom_call.1} parent=1 // pred_fallthru
      _
    %327 = vsyncpa [#allocation3], 1
    %328 = vsyncpa [#allocation6], 1
    %329 = vsyncpa [#allocation4], 1

</llo_original>
